<compile_context>
chip_gen: v5e
topology: v5e:2x2
jax: 0.10.0
libtpu: 0.0.40
codegen_flags: <defaults>
</compile_context>

<pallas_src>
import functools
import math

import jax
import jax.numpy as jnp
from jax.experimental import pallas as pl
from jax.experimental.pallas import tpu as pltpu

_LANES = 128           # TPU lane width; last dim of every tile
_MAX_TILE_ROWS = 2048  # 2048 rows x 128 lanes x 4 B = 1 MiB per f32 tile
                       # (fits comfortably inside scoped VMEM on v5e/v6e/v7x
                       #  with double-buffered in + out)


def _cosine_cutoff_kernel(d_ref, o_ref, *, scale, cutoff):
    """Elementwise Behler cosine cutoff on one (TILE_ROWS, 128) tile."""
    d = d_ref[...]
    f = 0.5 * (jnp.cos(d * scale) + 1.0)
    o_ref[...] = jnp.where(d < cutoff, f, jnp.zeros_like(f)).astype(o_ref.dtype)


def cosine_cutoff(distances: jax.Array, cutoff: float = 5.0) -> jax.Array:
    """Pallas TPU implementation of CosineCutoff.forward (any input shape)."""
    orig_shape = distances.shape
    orig_dtype = distances.dtype
    total = math.prod(orig_shape)

    # Flatten to a lane-dense 2-D slab: (rows, 128).
    n_rows = pl.cdiv(total, _LANES)

    # Tile rows: multiple of 8 (sublane constraint), capped at ~1 MiB tiles.
    tile_rows = min(_MAX_TILE_ROWS, ((n_rows + 7) // 8) * 8)

    # Pad row count to a multiple of tile_rows (padded values get sliced off;
    # their function values are irrelevant).
    n_rows_padded = ((n_rows + tile_rows - 1) // tile_rows) * tile_rows
    padded_total = n_rows_padded * _LANES

    flat = distances.reshape(-1)
    if padded_total != total:
        flat = jnp.pad(flat, (0, padded_total - total))
    x2d = flat.reshape(n_rows_padded, _LANES)

    kernel = functools.partial(
        _cosine_cutoff_kernel,
        scale=math.pi / float(cutoff),
        cutoff=float(cutoff),
    )

    out2d = pl.pallas_call(
        kernel,
        out_shape=jax.ShapeDtypeStruct((n_rows_padded, _LANES), orig_dtype),
        grid=(n_rows_padded // tile_rows,),
        in_specs=[pl.BlockSpec((tile_rows, _LANES), lambda i: (i, 0))],
        out_specs=pl.BlockSpec((tile_rows, _LANES), lambda i: (i, 0)),
        compiler_params=pltpu.CompilerParams(
            dimension_semantics=("parallel",),
        ),
    )(x2d)

    return out2d.reshape(-1)[:total].reshape(orig_shape)


def cosine_cutoff_ref(distances: jax.Array, cutoff: float = 5.0) -> jax.Array:
    """Pure-JAX reference (mirrors the PyTorch forward)."""
    f = 0.5 * (jnp.cos(distances * math.pi / cutoff) + 1.0)
    return f * (distances < cutoff).astype(distances.dtype)


if __name__ == "__main__":
    key = jax.random.PRNGKey(0)

    # Shape 1: lane-aligned [B, A, NBR] SchNetPack-style distances.
    B, A, NBR = 2, 8, 128
    k1, k2 = jax.random.split(key)
    d1 = jax.random.uniform(k1, (B, A, NBR), dtype=jnp.float32) * 8.0  # spans both branches
    out1 = jax.block_until_ready(cosine_cutoff(d1, cutoff=5.0))
    ref1 = cosine_cutoff_ref(d1, cutoff=5.0)
    assert out1.shape == d1.shape and out1.dtype == d1.dtype
    assert jnp.allclose(out1, ref1, atol=1e-5, rtol=1e-5)

    # Shape 2: ragged neighbor count (exercises flatten + pad path).
    d2 = jax.random.uniform(k2, (2, 7, 100), dtype=jnp.float32) * 8.0
    out2 = jax.block_until_ready(cosine_cutoff(d2, cutoff=5.0))
    ref2 = cosine_cutoff_ref(d2, cutoff=5.0)
    assert out2.shape == d2.shape and out2.dtype == d2.dtype
    assert jnp.allclose(out2, ref2, atol=1e-5, rtol=1e-5)

    print("KERNEL_OK")
</pallas_src>

<mosaic_0001>
module attributes {stable_mosaic.version = 11 : i64} {
  func.func @_cosine_cutoff_kernel(%arg0: i32, %arg1: memref<16x128xf32, #tpu.memory_space<vmem>>, %arg2: memref<16x128xf32, #tpu.memory_space<vmem>>) attributes {dimension_semantics = [#tpu.dimension_semantics<parallel>], iteration_bounds = array<i64: 1>, scalar_prefetch = 0 : i64, scratch_operands = 0 : i64, tpu.core_type = #tpu.core_type<tc>, window_params = [{transform_indices = @transform_0, window_bounds = array<i64: 16, 128>}, {transform_indices = @transform_1, window_bounds = array<i64: 16, 128>}]} {
    %c0 = arith.constant 0 : index
    %c0_0 = arith.constant 0 : index
    %0 = vector.load %arg1[%c0, %c0_0] : memref<16x128xf32, #tpu.memory_space<vmem>>, vector<16x128xf32>
    %cst = arith.constant 0.628318548 : f32
    %1 = vector.broadcast %cst : f32 to vector<16x128xf32>
    %2 = arith.mulf %0, %1 : vector<16x128xf32>
    %3 = math.cos %2 : vector<16x128xf32>
    %cst_1 = arith.constant 1.000000e+00 : f32
    %4 = vector.broadcast %cst_1 : f32 to vector<16x128xf32>
    %5 = arith.addf %3, %4 : vector<16x128xf32>
    %cst_2 = arith.constant 5.000000e-01 : f32
    %6 = vector.broadcast %cst_2 : f32 to vector<16x128xf32>
    %7 = arith.mulf %6, %5 : vector<16x128xf32>
    %cst_3 = arith.constant 5.000000e+00 : f32
    %8 = vector.broadcast %cst_3 : f32 to vector<16x128xf32>
    %9 = arith.cmpf olt, %0, %8 : vector<16x128xf32>
    %cst_4 = arith.constant 0.000000e+00 : f32
    %10 = vector.broadcast %cst_4 : f32 to vector<16x128xf32>
    %11 = arith.select %9, %7, %10 : vector<16x128xi1>, vector<16x128xf32>
    %c0_5 = arith.constant 0 : index
    %c0_6 = arith.constant 0 : index
    %12 = vector.load %arg2[%c0_5, %c0_6] : memref<16x128xf32, #tpu.memory_space<vmem>>, vector<16x128xf32>
    tpu.vector_store %arg2[%c0_5, %c0_6], %11 {strides = array<i32>} : memref<16x128xf32, #tpu.memory_space<vmem>>, vector<16x128xf32>,
    return
  }
  func.func @transform_0(%arg0: i32) -> (i32, i32) {
    %c0_i32 = arith.constant 0 : i32
    %c0_i32_0 = arith.constant 0 : i32
    return %arg0, %c0_i32 : i32, i32
  }
  func.func @transform_1(%arg0: i32) -> (i32, i32) {
    %c0_i32 = arith.constant 0 : i32
    %c0_i32_0 = arith.constant 0 : i32
    return %arg0, %c0_i32 : i32, i32
  }
}

</mosaic_0001>

<llo_original>
// kernel: tpu_custom_call.1
$region0: #{tpu_custom_call.1}
  #allocation0 [shape = 'u32[]', space=smem, size = 0x4, offset = 0x4, fixed_abs, tag = 'smem constant byte address 0x4 - core index']
  #allocation1 [shape = 'u32[72,128]{1,0:T(1,128)}', space=vmem, size = 0x9000, scoped, tag = 'internal scratch']
  %s0 = inlined_call_operand.hbm [shape: f32[16,128], index: 0, kind: input, shape index: {}]
  %s1 = inlined_call_operand.hbm [shape: f32[16,128], index: 1, kind: output, shape index: {}]
  %s2 = sld [smem:[#allocation0]]
  $region18: #{tpu_custom_call.1} parent=0
    _
  %s4 = ssub.s32 1, %s2
  %s5 = scalar_select 0, %s4, %s2
  $region1: #{tpu_custom_call.1} parent=0
    #allocation2 [shape = 'u8[8192]{0}', space=vmem, size = 0x2000, scoped, tag = 'input window, operand 0, single buffered']
    #allocation3 [shape = 's32[1]{0}', space=sflag, size = 0x4, scoped, tag = 'scoped memory for tpu_custom_call.1']
    #allocation4 [shape = 's32[1]{0}', space=sflag, size = 0x4, scoped, tag = 'scoped memory for tpu_custom_call.1']
    #allocation5 [shape = 'u8[8192]{0}', space=vmem, size = 0x2000, scoped, tag = 'output window, operand 0, single buffered']
    %6 = vsyncpa [#allocation3], 0
    %7 = vsyncpa [#allocation4], 0
    // Predicated region
    $region2: #{tpu_custom_call.1} parent=1 // pred_check
      _
    $region3: #{tpu_custom_call.1} parent=1 // pred_check_branch
      %9 = sbr.rel (0) target = $region5
    $region4: #{tpu_custom_call.1} parent=1 // pred_region
      %11 = vsyncadd [#allocation3], 0
      %s12 = sshll.u32 %s0, 4
      %s13 = int_to_ptr.hbm [resolvable:$true] %s12
      %s14 = sshll.u32 [#allocation2], 4
      %s15 = int_to_ptr.vmem [resolvable:$true] %s14
      %20 = dma.hbm_to_vmem [thread:$0]  %s13, 256, %s15, [#allocation3], 128, 128, 8
    $region5: #{tpu_custom_call.1} parent=1 // pred_fallthru
      _
    // Predicated region
    $region6: #{tpu_custom_call.1} parent=1 // pred_check
      _
    $region7: #{tpu_custom_call.1} parent=1 // pred_check_branch
      %22 = sbr.rel (0) target = $region9
    $region8: #{tpu_custom_call.1} parent=1 // pred_region
      %24 = dma.done [#allocation3], 256
    $region9: #{tpu_custom_call.1} parent=1 // pred_fallthru
      _
    %v25 = vld [vmem:[#allocation2] sm:$0xff]
    %v26 = vld [vmem:[#allocation2 + $0x8] sm:$0xff]
    %v27 = vmul.f32 %v25, 0.62831855
    %v28 = vmul.f32 %v26, 0.62831855
    %v29 = vand.u32 2147483647, %v27
    %vm30 = vcmp.le.f32.partialorder %v29, 0.7853982
    %vm31 = vcmp.lt.s32.totalorder %v27, 0
    %v32 = vand.u32 %v27, 2139095040
    %v33 = vshrl.u32 %v32, 23
    %v34 = vsub.s32 %v33, 127
    %v35 = vand.u32 2147483647, %v27
    %v36 = vand.u32 %v35, 8388607
    %v37 = vor.u32 %v36, 8388608
    %v38 = vsub.s32 0, %v37
    %v39 = vadd.s32 %v34, 1
    %vm40 = vcmp.gt.s32.totalorder %v39, 0
    %v41 = vsel %vm40, %v39, 0
    %v42 = vshrl.u32 %v41, 5
    %v43 = vand.u32 %v41, 31
    %v44 = vsub.s32 32, %v43
    %v45 = vshrl.u32 683565275, %v44
    %v46 = vshll.u32 683565275, %v43
    %v47 = vshrl.u32 2475754826, %v44
    %v48 = vor.u32 %v46, %v47
    %v49 = vshll.u32 2475754826, %v43
    %v50 = vshrl.u32 2131351028, %v44
    %v51 = vor.u32 %v49, %v50
    %v52 = vshll.u32 2131351028, %v43
    %v53 = vshrl.u32 2102212464, %v44
    %v54 = vor.u32 %v52, %v53
    %v55 = vshll.u32 2102212464, %v43
    %v56 = vshrl.u32 920167782, %v44
    %v57 = vor.u32 %v55, %v56
    %v58 = vshll.u32 920167782, %v43
    %v59 = vshrl.u32 1326507024, %v44
    %v60 = vor.u32 %v58, %v59
    %vm61 = vcmp.lt.s32.totalorder %v42, 1
    %vm62 = vcmp.lt.s32.totalorder %v42, 2
    %vm63 = vcmp.lt.s32.totalorder %v42, 3
    %vm64 = vcmp.lt.s32.totalorder %v42, 4
    %v65 = vsel %vm61, %v45, %v48
    %v66 = vsel %vm64, %v54, 2102212464
    %v67 = vsel %vm63, %v51, %v66
    %v68 = vsel %vm62, %v65, %v67
    %v69 = vsel %vm61, %v48, %v51
    %v70 = vsel %vm64, %v57, 920167782
    %v71 = vsel %vm63, %v54, %v70
    %v72 = vsel %vm62, %v69, %v71
    %v73 = vsel %vm61, %v51, %v54
    %v74 = vsel %vm64, %v60, 1326507024
    %v75 = vsel %vm63, %v57, %v74
    %v76 = vsel %vm62, %v73, %v75
    %v77 = vshll.u32 %v37, 8
    %v78 = vand.u32 %v77, 65535
    %v79 = vshrl.u32 %v77, 16
    %v80 = vand.u32 %v76, 65535
    %v81 = vshrl.u32 %v76, 16
    %v82 = vmul.u32 %v78, %v80
    %v83 = vmul.u32 %v78, %v81
    %v84 = vmul.u32 %v79, %v80
    %v85 = vmul.u32 %v79, %v81
    %v86 = vshll.u32 %v83, 16
    %v87 = vshrl.u32 %v83, 16
    %v88 = vshll.u32 %v84, 16
    %v89 = vshrl.u32 %v84, 16
    %vm90 = vc.u32 %v82, %v86
    %v91 = vsel %vm90, 1, 0
    %v92 = vadd.s32 %v82, %v86
    %v93 = vadd.s32 %v85, %v91
    %vm94 = vc.u32 %v92, %v88
    %v95 = vsel %vm94, 1, 0
    %v96 = vadd.s32 %v92, %v88
    %v97 = vadd.s32 %v93, %v95
    %v98 = vadd.s32 %v97, %v87
    %v99 = vadd.s32 %v98, %v89
    %v100 = vand.u32 %v77, 65535
    %v101 = vshrl.u32 %v77, 16
    %v102 = vand.u32 %v72, 65535
    %v103 = vshrl.u32 %v72, 16
    %v104 = vmul.u32 %v100, %v102
    %v105 = vmul.u32 %v100, %v103
    %v106 = vmul.u32 %v101, %v102
    %v107 = vmul.u32 %v101, %v103
    %v108 = vshll.u32 %v105, 16
    %v109 = vshrl.u32 %v105, 16
    %v110 = vshll.u32 %v106, 16
    %v111 = vshrl.u32 %v106, 16
    %vm112 = vc.u32 %v104, %v108
    %v113 = vsel %vm112, 1, 0
    %v114 = vadd.s32 %v104, %v108
    %v115 = vadd.s32 %v107, %v113
    %vm116 = vc.u32 %v114, %v110
    %v117 = vsel %vm116, 1, 0
    %v118 = vadd.s32 %v114, %v110
    %v119 = vadd.s32 %v115, %v117
    %v120 = vadd.s32 %v119, %v109
    %v121 = vadd.s32 %v120, %v111
    %v122 = vmul.u32 %v77, %v68
    %v123 = vadd.s32 %v99, %v118
    %vm124 = vc.u32 %v99, %v118
    %v125 = vadd.s32 %v121, 1
    %v126 = vsel %vm124, %v125, %v121
    %v127 = vadd.s32 %v122, %v126
    %v128 = vadd.s32 %v127, 536870912
    %v129 = vshrl.u32 %v128, 30
    %v130 = vshll.u32 %v129, 30
    %v131 = vsub.s32 %v127, %v130
    %vm132 = vcmp.lt.s32.totalorder %v131, 0
    %v133 = vsub.s32 0, %v131
    %v134 = vsel %vm132, %v133, %v131
    %v135 = vclz %v134
    %v136 = vsub.s32 %v135, 2
    %vm137 = vcmp.gt.s32.totalorder 0, %v136
    %v138 = vsel %vm137, 0, %v136
    %v139 = vsub.s32 32, %v138
    %v140 = vshll.u32 %v131, %v138
    %v141 = vshrl.u32 %v123, %v139
    %v142 = vor.u32 %v140, %v141
    %v143 = vsub.s32 4294967266, %v138
    %v144 = vadd.s32 %v143, 127
    %v145 = vshll.u32 %v144, 23
    %v146 = vor.u32 4788187, %v145
    %v147 = vand.u32 2147483647, %v146
    %v149 = vcvt.s32.f32 %v142
    %v150 = vmul.f32 %v149, %v147
    %v151 = vxor.u32 %v150, 2147483648
    %v152 = vsel %vm31, %v151, %v150
    %v153 = vsub.s32 4, %v129
    %v154 = vsel %vm31, %v153, %v129
    %v155 = vsel %vm30, %v27, %v152
    %v156 = vsel %vm30, 0, %v154
    %v157 = vmul.f32 %v155, %v155
    %v158 = vmul.f32 %v157, -0.001358992
    %v159 = vadd.f32 %v158, 0.041655596
    %v160 = vmul.f32 %v157, %v159
    %v161 = vadd.f32 %v160, -0.4999988
    %v162 = vmul.f32 %v157, %v161
    %v163 = vadd.f32 1.0, %v162
    %v164 = vmul.f32 %v155, %v155
    %v165 = vmul.f32 %v164, -0.00019511016
    %v166 = vadd.f32 %v165, 0.008332121
    %v167 = vmul.f32 %v164, %v166
    %v168 = vadd.f32 %v167, -0.16666654
    %v169 = vmul.f32 %v164, %v168
    %v170 = vadd.f32 %v169, 1.0
    %v171 = vmul.f32 %v170, %v155
    %vm172 = vweird.f32 %v27
    %v173 = vand.u32 %v156, 3
    %vm174 = vcmp.lt.s32.totalorder %v173, 2
    %vm175 = vcmp.eq.s32.totalorder %v173, 0
    %v176 = vxor.u32 %v171, 2147483648
    %v177 = vsel %vm175, %v163, %v176
    %vm178 = vcmp.eq.s32.totalorder %v173, 2
    %v179 = vxor.u32 %v163, 2147483648
    %v180 = vsel %vm178, %v179, %v171
    %v181 = vsel %vm174, %v177, %v180
    %v182 = vsel %vm172, nan, %v181
    %v183 = vand.u32 2147483647, %v28
    %vm184 = vcmp.le.f32.partialorder %v183, 0.7853982
    %vm185 = vcmp.lt.s32.totalorder %v28, 0
    %v186 = vand.u32 %v28, 2139095040
    %v187 = vshrl.u32 %v186, 23
    %v188 = vsub.s32 %v187, 127
    %v189 = vand.u32 2147483647, %v28
    %v190 = vand.u32 %v189, 8388607
    %v191 = vor.u32 %v190, 8388608
    %v192 = vsub.s32 0, %v191
    %v193 = vadd.s32 %v188, 1
    %vm194 = vcmp.gt.s32.totalorder %v193, 0
    %v195 = vsel %vm194, %v193, 0
    %v196 = vshrl.u32 %v195, 5
    %v197 = vand.u32 %v195, 31
    %v198 = vsub.s32 32, %v197
    %v199 = vshrl.u32 683565275, %v198
    %v200 = vshll.u32 683565275, %v197
    %v201 = vshrl.u32 2475754826, %v198
    %v202 = vor.u32 %v200, %v201
    %v203 = vshll.u32 2475754826, %v197
    %v204 = vshrl.u32 2131351028, %v198
    %v205 = vor.u32 %v203, %v204
    %v206 = vshll.u32 2131351028, %v197
    %v207 = vshrl.u32 2102212464, %v198
    %v208 = vor.u32 %v206, %v207
    %v209 = vshll.u32 2102212464, %v197
    %v210 = vshrl.u32 920167782, %v198
    %v211 = vor.u32 %v209, %v210
    %v212 = vshll.u32 920167782, %v197
    %v213 = vshrl.u32 1326507024, %v198
    %v214 = vor.u32 %v212, %v213
    %vm215 = vcmp.lt.s32.totalorder %v196, 1
    %vm216 = vcmp.lt.s32.totalorder %v196, 2
    %vm217 = vcmp.lt.s32.totalorder %v196, 3
    %vm218 = vcmp.lt.s32.totalorder %v196, 4
    %v219 = vsel %vm215, %v199, %v202
    %v220 = vsel %vm218, %v208, 2102212464
    %v221 = vsel %vm217, %v205, %v220
    %v222 = vsel %vm216, %v219, %v221
    %v223 = vsel %vm215, %v202, %v205
    %v224 = vsel %vm218, %v211, 920167782
    %v225 = vsel %vm217, %v208, %v224
    %v226 = vsel %vm216, %v223, %v225
    %v227 = vsel %vm215, %v205, %v208
    %v228 = vsel %vm218, %v214, 1326507024
    %v229 = vsel %vm217, %v211, %v228
    %v230 = vsel %vm216, %v227, %v229
    %v231 = vshll.u32 %v191, 8
    %v232 = vand.u32 %v231, 65535
    %v233 = vshrl.u32 %v231, 16
    %v234 = vand.u32 %v230, 65535
    %v235 = vshrl.u32 %v230, 16
    %v236 = vmul.u32 %v232, %v234
    %v237 = vmul.u32 %v232, %v235
    %v238 = vmul.u32 %v233, %v234
    %v239 = vmul.u32 %v233, %v235
    %v240 = vshll.u32 %v237, 16
    %v241 = vshrl.u32 %v237, 16
    %v242 = vshll.u32 %v238, 16
    %v243 = vshrl.u32 %v238, 16
    %vm244 = vc.u32 %v236, %v240
    %v245 = vsel %vm244, 1, 0
    %v246 = vadd.s32 %v236, %v240
    %v247 = vadd.s32 %v239, %v245
    %vm248 = vc.u32 %v246, %v242
    %v249 = vsel %vm248, 1, 0
    %v250 = vadd.s32 %v246, %v242
    %v251 = vadd.s32 %v247, %v249
    %v252 = vadd.s32 %v251, %v241
    %v253 = vadd.s32 %v252, %v243
    %v254 = vand.u32 %v231, 65535
    %v255 = vshrl.u32 %v231, 16
    %v256 = vand.u32 %v226, 65535
    %v257 = vshrl.u32 %v226, 16
    %v258 = vmul.u32 %v254, %v256
    %v259 = vmul.u32 %v254, %v257
    %v260 = vmul.u32 %v255, %v256
    %v261 = vmul.u32 %v255, %v257
    %v262 = vshll.u32 %v259, 16
    %v263 = vshrl.u32 %v259, 16
    %v264 = vshll.u32 %v260, 16
    %v265 = vshrl.u32 %v260, 16
    %vm266 = vc.u32 %v258, %v262
    %v267 = vsel %vm266, 1, 0
    %v268 = vadd.s32 %v258, %v262
    %v269 = vadd.s32 %v261, %v267
    %vm270 = vc.u32 %v268, %v264
    %v271 = vsel %vm270, 1, 0
    %v272 = vadd.s32 %v268, %v264
    %v273 = vadd.s32 %v269, %v271
    %v274 = vadd.s32 %v273, %v263
    %v275 = vadd.s32 %v274, %v265
    %v276 = vmul.u32 %v231, %v222
    %v277 = vadd.s32 %v253, %v272
    %vm278 = vc.u32 %v253, %v272
    %v279 = vadd.s32 %v275, 1
    %v280 = vsel %vm278, %v279, %v275
    %v281 = vadd.s32 %v276, %v280
    %v282 = vadd.s32 %v281, 536870912
    %v283 = vshrl.u32 %v282, 30
    %v284 = vshll.u32 %v283, 30
    %v285 = vsub.s32 %v281, %v284
    %vm286 = vcmp.lt.s32.totalorder %v285, 0
    %v287 = vsub.s32 0, %v285
    %v288 = vsel %vm286, %v287, %v285
    %v289 = vclz %v288
    %v290 = vsub.s32 %v289, 2
    %vm291 = vcmp.gt.s32.totalorder 0, %v290
    %v292 = vsel %vm291, 0, %v290
    %v293 = vsub.s32 32, %v292
    %v294 = vshll.u32 %v285, %v292
    %v295 = vshrl.u32 %v277, %v293
    %v296 = vor.u32 %v294, %v295
    %v297 = vsub.s32 4294967266, %v292
    %v298 = vadd.s32 %v297, 127
    %v299 = vshll.u32 %v298, 23
    %v300 = vor.u32 4788187, %v299
    %v301 = vand.u32 2147483647, %v300
    %v303 = vcvt.s32.f32 %v296
    %v304 = vmul.f32 %v303, %v301
    %v305 = vxor.u32 %v304, 2147483648
    %v306 = vsel %vm185, %v305, %v304
    %v307 = vsub.s32 4, %v283
    %v308 = vsel %vm185, %v307, %v283
    %v309 = vsel %vm184, %v28, %v306
    %v310 = vsel %vm184, 0, %v308
    %v311 = vmul.f32 %v309, %v309
    %v312 = vmul.f32 %v311, -0.001358992
    %v313 = vadd.f32 %v312, 0.041655596
    %v314 = vmul.f32 %v311, %v313
    %v315 = vadd.f32 %v314, -0.4999988
    %v316 = vmul.f32 %v311, %v315
    %v317 = vadd.f32 1.0, %v316
    %v318 = vmul.f32 %v309, %v309
    %v319 = vmul.f32 %v318, -0.00019511016
    %v320 = vadd.f32 %v319, 0.008332121
    %v321 = vmul.f32 %v318, %v320
    %v322 = vadd.f32 %v321, -0.16666654
    %v323 = vmul.f32 %v318, %v322
    %v324 = vadd.f32 %v323, 1.0
    %v325 = vmul.f32 %v324, %v309
    %vm326 = vweird.f32 %v28
    %v327 = vand.u32 %v310, 3
    %vm328 = vcmp.lt.s32.totalorder %v327, 2
    %vm329 = vcmp.eq.s32.totalorder %v327, 0
    %v330 = vxor.u32 %v325, 2147483648
    %v331 = vsel %vm329, %v317, %v330
    %vm332 = vcmp.eq.s32.totalorder %v327, 2
    %v333 = vxor.u32 %v317, 2147483648
    %v334 = vsel %vm332, %v333, %v325
    %v335 = vsel %vm328, %v331, %v334
    %v336 = vsel %vm326, nan, %v335
    %v337 = vadd.f32 %v182, 1.0
    %v338 = vadd.f32 %v336, 1.0
    %v339 = vmul.f32 %v337, 0.5
    %v340 = vmul.f32 %v338, 0.5
    %vm341 = vcmp.lt.f32.partialorder %v25, 5.0
    %vm342 = vcmp.lt.f32.partialorder %v26, 5.0
    %v343 = vsel %vm341, %v339, 0.0
    %v344 = vsel %vm342, %v340, 0.0
    %345 = vst [vmem:[#allocation5] sm:$0xff] %v343
    %346 = vst [vmem:[#allocation5 + $0x8] sm:$0xff] %v344
    // Predicated region
    $region10: #{tpu_custom_call.1} parent=1 // pred_check
      _
    $region11: #{tpu_custom_call.1} parent=1 // pred_check_branch
      %348 = sbr.rel (0) target = $region13
    $region12: #{tpu_custom_call.1} parent=1 // pred_region
      %350 = vsyncadd [#allocation4], 0
      %s351 = sshll.u32 [#allocation5], 4
      %s352 = int_to_ptr.vmem [resolvable:$true] %s351
      %s353 = sshll.u32 %s1, 4
      %s354 = int_to_ptr.hbm [resolvable:$true] %s353
      %359 = dma.vmem_to_hbm [thread:$0]  %s352, 256, %s354, [#allocation4], 128, 128, 8
    $region13: #{tpu_custom_call.1} parent=1 // pred_fallthru
      _
    // Predicated region
    $region14: #{tpu_custom_call.1} parent=1 // pred_check
      _
    $region15: #{tpu_custom_call.1} parent=1 // pred_check_branch
      %361 = sbr.rel (0) target = $region17
    $region16: #{tpu_custom_call.1} parent=1 // pred_region
      %363 = dma.done [#allocation4], 256
    $region17: #{tpu_custom_call.1} parent=1 // pred_fallthru
      _
    %364 = vsyncpa [#allocation3], 1
    %365 = vsyncpa [#allocation4], 1

</llo_original>
